<compile_context>
chip_gen: v6e
topology: v6e:2x2x1
jax: 0.10.0
libtpu: 0.0.40
codegen_flags: <defaults>
</compile_context>

<pallas_src>
import jax
import jax.numpy as jnp
from jax import lax
from jax.experimental import pallas as pl
from jax.experimental.pallas import tpu as pltpu

EPS = 1e-5


def _pick_batch_block(N, c_in, c_out, HW):
    """Samples per grid step: amortize per-step overhead, stay VMEM-safe,
    keep >= 2 grid steps (when N >= 2) so v7x megacore has work per core."""
    per_sample_bytes = (c_in + 4 * c_out) * HW * 4  # rough f32 working set
    budget = 4 << 20                                 # conservative for 64MiB v7x
    bmax = max(1, budget // max(per_sample_bytes, 1))
    if N >= 2:
        bmax = min(bmax, N // 2)
    bmax = max(1, min(bmax, N))
    for b in range(bmax, 0, -1):                     # largest divisor of N <= bmax
        if N % b == 0:
            return b
    return 1


def _make_bottleneck_kernel(H, W, planes, pp, c_out, B, mxu_dtype):
    HW = H * W
    inv_hw = 1.0 / float(HW)
    offsets = [(dy, dx) for dy in (-1, 0, 1) for dx in (-1, 0, 1)]

    def inorm(y, gamma, beta):
        # One-pass folded instance norm, f32 stats. y: (C, HW) f32.
        s1 = jnp.sum(y, axis=-1, keepdims=True)
        s2 = jnp.sum(y * y, axis=-1, keepdims=True)
        mean = s1 * inv_hw
        var = jnp.maximum(s2 * inv_hw - mean * mean, 0.0)
        scale = gamma * lax.rsqrt(var + EPS)
        bias = beta - mean * scale
        return y * scale + bias

    def kernel(x_ref, w1s_ref, w2_ref, w3_ref, mask_ref, gbp_ref, gbe_ref,
               out_ref):
        # Packed affine params (f32): columns [gamma, beta, gamma, beta].
        g1, b1 = gbp_ref[:, 0:1], gbp_ref[:, 1:2]
        g2, b2 = gbp_ref[:, 2:3], gbp_ref[:, 3:4]
        g3, b3 = gbe_ref[:, 0:1], gbe_ref[:, 1:2]
        gs, bs = gbe_ref[:, 2:3], gbe_ref[:, 3:4]

        w1s = w1s_ref[...]   # (pp + c_out, C_in), mxu_dtype (pre-cast)
        w2 = w2_ref[...]     # (planes, 9*planes), mxu_dtype
        w3 = w3_ref[...]     # (c_out, planes),    mxu_dtype

        for b in range(B):   # B independent per-sample chains (ILP for LLO)
            x = x_ref[b].astype(mxu_dtype)            # (C_in, HW)

            # --- conv1 + shortcut (M-fused 1x1) -> instance norms ---
            y1s = jnp.dot(w1s, x, preferred_element_type=jnp.float32)
            y1 = jnp.maximum(inorm(y1s[:planes], g1, b1), 0.0)     # (planes, HW)
            sc = inorm(y1s[pp:pp + c_out], gs, bs)                 # (c_out, HW)

            # --- conv2 (3x3, stride=1, pad=1): K-fused 9-tap matmul ---
            taps = []
            for t, (dy, dx) in enumerate(offsets):
                if dy == 0 and dx == 0:
                    taps.append(y1)                    # center: mask all-true
                else:
                    shift = (-(dy * W + dx)) % HW
                    tap = pltpu.roll(y1, shift, axis=1)            # XLU slot
                    taps.append(tap * mask_ref[t:t + 1, :])        # f32 mask
            rhs = jnp.concatenate(taps, axis=0).astype(mxu_dtype)  # (9*planes, HW)
            y2 = jnp.dot(w2, rhs, preferred_element_type=jnp.float32)
            y2 = jnp.maximum(inorm(y2, g2, b2), 0.0)

            # --- conv3 (1x1) -> instance norm ---
            y3 = jnp.dot(w3, y2.astype(mxu_dtype),
                         preferred_element_type=jnp.float32)
            y3 = inorm(y3, g3, b3)

            # Residual add + relu in f32.
            out_ref[b] = jnp.maximum(y3 + sc, 0.0).astype(out_ref.dtype)

    return kernel


def bottleneck_forward(x, p, *, mxu_dtype=jnp.float32, out_dtype=jnp.float32):
    N, C_in, H, W = x.shape
    HW = H * W
    planes = p['w1'].shape[0]
    c_out = p['w3'].shape[0]
    pp = -(-planes // 8) * 8            # conv1 rows padded to sublane multiple
    B = _pick_batch_block(N, C_in, c_out, HW)
    assert N % B == 0

    # Lane-dense layout: NCHW -> (N, C, H*W). Free reshape for contiguous x.
    x2 = x.reshape(N, C_in, HW)

    # conv1 + shortcut M-fused weight; pre-cast to mxu_dtype (resident).
    w1s = jnp.zeros((pp + c_out, C_in), mxu_dtype)
    w1s = w1s.at[:planes, :].set(p['w1'].astype(mxu_dtype))
    w1s = w1s.at[pp:pp + c_out, :].set(p['ws'].astype(mxu_dtype))

    # 3x3 weights as one (planes, 9*planes) LHS; K-column block t = ky*3+kx
    # holds w2[:, :, ky, kx] (matches the tap stacking order in the kernel).
    w2_lhs = jnp.transpose(p['w2'], (0, 2, 3, 1)).reshape(planes, 9 * planes)
    w2_lhs = w2_lhs.astype(mxu_dtype)
    w3 = p['w3'].astype(mxu_dtype)

    # Grid-invariant 3x3 boundary masks, precomputed once: (9, HW) f32 0/1.
    pos = jnp.arange(HW, dtype=jnp.int32)
    hh, ww = pos // W, pos % W
    mask_rows = []
    for dy in (-1, 0, 1):
        for dx in (-1, 0, 1):
            m = ((hh + dy >= 0) & (hh + dy < H) &
                 (ww + dx >= 0) & (ww + dx < W))
            mask_rows.append(m.astype(jnp.float32))
    masks = jnp.stack(mask_rows, axis=0)

    # Pack the 8 per-channel affine vectors into two lane-contiguous arrays.
    gbp = jnp.stack([p['g1'], p['b1'], p['g2'], p['b2']], axis=1)  # (planes, 4)
    gbe = jnp.stack([p['g3'], p['b3'], p['gs'], p['bs']], axis=1)  # (c_out, 4)
    gbp = gbp.astype(jnp.float32)
    gbe = gbe.astype(jnp.float32)

    def full(shape):
        nd = len(shape)
        return pl.BlockSpec(shape, lambda n, _nd=nd: (0,) * _nd)

    kernel = _make_bottleneck_kernel(H, W, planes, pp, c_out, B, mxu_dtype)

    grid_spec = pltpu.PrefetchScalarGridSpec(
        num_scalar_prefetch=0,
        grid=(N // B,),
        in_specs=[
            pl.BlockSpec((B, C_in, HW), lambda n: (n, 0, 0)),
            full((pp + c_out, C_in)),
            full((planes, 9 * planes)),
            full((c_out, planes)),
            full((9, HW)),
            full((planes, 4)),
            full((c_out, 4)),
        ],
        out_specs=pl.BlockSpec((B, c_out, HW), lambda n: (n, 0, 0)),
    )

    out = pl.pallas_call(
        kernel,
        out_shape=jax.ShapeDtypeStruct((N, c_out, HW), out_dtype),
        grid_spec=grid_spec,
        compiler_params=pltpu.CompilerParams(
            dimension_semantics=("parallel",)),  # batch blocks independent
    )(x2, w1s, w2_lhs, w3, masks, gbp, gbe)

    return out.reshape(N, c_out, H, W)


# ---------------- pure-JAX reference (for correctness check) ----------------
def ref_forward(x, p):
    def conv(x, w, pad=0):
        return lax.conv_general_dilated(
            x, w, (1, 1), [(pad, pad), (pad, pad)],
            dimension_numbers=('NCHW', 'OIHW', 'NCHW'))

    def inorm(x, g, b):
        mean = x.mean(axis=(2, 3), keepdims=True)
        var = ((x - mean) ** 2).mean(axis=(2, 3), keepdims=True)
        xn = (x - mean) * lax.rsqrt(var + EPS)
        return xn * g[None, :, None, None] + b[None, :, None, None]

    w1_4d = p['w1'][:, :, None, None]
    w3_4d = p['w3'][:, :, None, None]
    ws_4d = p['ws'][:, :, None, None]

    out = jax.nn.relu(inorm(conv(x, w1_4d), p['g1'], p['b1']))
    out = jax.nn.relu(inorm(conv(out, p['w2'], pad=1), p['g2'], p['b2']))
    out = inorm(conv(out, w3_4d), p['g3'], p['b3'])
    sc = inorm(conv(x, ws_4d), p['gs'], p['bs'])
    return jax.nn.relu(out + sc)


if __name__ == "__main__":
    key = jax.random.PRNGKey(0)
    N, C_in, planes, H, W = 2, 4, 4, 16, 16
    c_out = 4 * planes  # expansion = 4

    ks = jax.random.split(key, 13)
    p = {
        'w1': 0.2 * jax.random.normal(ks[0], (planes, C_in), jnp.float32),
        'w2': 0.2 * jax.random.normal(ks[1], (planes, planes, 3, 3), jnp.float32),
        'w3': 0.2 * jax.random.normal(ks[2], (c_out, planes), jnp.float32),
        'ws': 0.2 * jax.random.normal(ks[3], (c_out, C_in), jnp.float32),
        'g1': 1.0 + 0.1 * jax.random.normal(ks[4], (planes,), jnp.float32),
        'b1': 0.1 * jax.random.normal(ks[5], (planes,), jnp.float32),
        'g2': 1.0 + 0.1 * jax.random.normal(ks[6], (planes,), jnp.float32),
        'b2': 0.1 * jax.random.normal(ks[7], (planes,), jnp.float32),
        'g3': 1.0 + 0.1 * jax.random.normal(ks[8], (c_out,), jnp.float32),
        'b3': 0.1 * jax.random.normal(ks[9], (c_out,), jnp.float32),
        'gs': 1.0 + 0.1 * jax.random.normal(ks[10], (c_out,), jnp.float32),
        'bs': 0.1 * jax.random.normal(ks[11], (c_out,), jnp.float32),
    }
    x = jax.random.normal(ks[12], (N, C_in, H, W), jnp.float32)

    ref = ref_forward(x, p)

    # f32 MXU path: matches the f32 PyTorch module.
    out = jax.block_until_ready(bottleneck_forward(x, p))
    assert out.shape == (N, c_out, H, W), out.shape
    err = float(jnp.max(jnp.abs(out - ref)))
    assert err < 1e-4, f"f32 max abs error {err}"

    # bf16 MXU-operand path (recommended on v6e/v7x; stats/masks stay f32).
    out_bf16 = jax.block_until_ready(
        bottleneck_forward(x, p, mxu_dtype=jnp.bfloat16))
    err_bf16 = float(jnp.max(jnp.abs(out_bf16 - ref)))
    assert err_bf16 < 1e-1, f"bf16 max abs error {err_bf16}"

    print("KERNEL_OK")
</pallas_src>

<mosaic_0001>
module attributes {stable_mosaic.version = 11 : i64} {
  func.func @kernel(%arg0: i32, %arg1: memref<1x4x256xf32, #tpu.memory_space<vmem>>, %arg2: memref<24x4xf32, #tpu.memory_space<vmem>>, %arg3: memref<4x36xf32, #tpu.memory_space<vmem>>, %arg4: memref<16x4xf32, #tpu.memory_space<vmem>>, %arg5: memref<9x256xf32, #tpu.memory_space<vmem>>, %arg6: memref<4x4xf32, #tpu.memory_space<vmem>>, %arg7: memref<16x4xf32, #tpu.memory_space<vmem>>, %arg8: memref<1x16x256xf32, #tpu.memory_space<vmem>>) attributes {dimension_semantics = [#tpu.dimension_semantics<parallel>], iteration_bounds = array<i64: 2>, scalar_prefetch = 0 : i64, scratch_operands = 0 : i64, tpu.core_type = #tpu.core_type<tc>, window_params = [{transform_indices = @transform_0, window_bounds = array<i64: 1, 4, 256>}, {pipeline_mode = #tpu.pipeline_mode<synchronous>, transform_indices = @transform_1, window_bounds = array<i64: 24, 4>}, {pipeline_mode = #tpu.pipeline_mode<synchronous>, transform_indices = @transform_2, window_bounds = array<i64: 4, 36>}, {pipeline_mode = #tpu.pipeline_mode<synchronous>, transform_indices = @transform_3, window_bounds = array<i64: 16, 4>}, {pipeline_mode = #tpu.pipeline_mode<synchronous>, transform_indices = @transform_4, window_bounds = array<i64: 9, 256>}, {pipeline_mode = #tpu.pipeline_mode<synchronous>, transform_indices = @transform_5, window_bounds = array<i64: 4, 4>}, {pipeline_mode = #tpu.pipeline_mode<synchronous>, transform_indices = @transform_6, window_bounds = array<i64: 16, 4>}, {transform_indices = @transform_7, window_bounds = array<i64: 1, 16, 256>}]} {
    %c0 = arith.constant 0 : index
    %c0_0 = arith.constant 0 : index
    %0 = vector.load %arg6[%c0, %c0_0] : memref<4x4xf32, #tpu.memory_space<vmem>>, vector<4x1xf32>
    %c0_1 = arith.constant 0 : index
    %c1 = arith.constant 1 : index
    %1 = vector.load %arg6[%c0_1, %c1] : memref<4x4xf32, #tpu.memory_space<vmem>>, vector<4x1xf32>
    %c0_2 = arith.constant 0 : index
    %c2 = arith.constant 2 : index
    %2 = vector.load %arg6[%c0_2, %c2] : memref<4x4xf32, #tpu.memory_space<vmem>>, vector<4x1xf32>
    %c0_3 = arith.constant 0 : index
    %c3 = arith.constant 3 : index
    %3 = vector.load %arg6[%c0_3, %c3] : memref<4x4xf32, #tpu.memory_space<vmem>>, vector<4x1xf32>
    %c0_4 = arith.constant 0 : index
    %c0_5 = arith.constant 0 : index
    %4 = vector.load %arg7[%c0_4, %c0_5] : memref<16x4xf32, #tpu.memory_space<vmem>>, vector<16x1xf32>
    %c0_6 = arith.constant 0 : index
    %c1_7 = arith.constant 1 : index
    %5 = vector.load %arg7[%c0_6, %c1_7] : memref<16x4xf32, #tpu.memory_space<vmem>>, vector<16x1xf32>
    %c0_8 = arith.constant 0 : index
    %c2_9 = arith.constant 2 : index
    %6 = vector.load %arg7[%c0_8, %c2_9] : memref<16x4xf32, #tpu.memory_space<vmem>>, vector<16x1xf32>
    %c0_10 = arith.constant 0 : index
    %c3_11 = arith.constant 3 : index
    %7 = vector.load %arg7[%c0_10, %c3_11] : memref<16x4xf32, #tpu.memory_space<vmem>>, vector<16x1xf32>
    %c0_12 = arith.constant 0 : index
    %c0_13 = arith.constant 0 : index
    %8 = vector.load %arg2[%c0_12, %c0_13] : memref<24x4xf32, #tpu.memory_space<vmem>>, vector<24x4xf32>
    %c0_14 = arith.constant 0 : index
    %c0_15 = arith.constant 0 : index
    %9 = vector.load %arg3[%c0_14, %c0_15] : memref<4x36xf32, #tpu.memory_space<vmem>>, vector<4x36xf32>
    %c0_16 = arith.constant 0 : index
    %c0_17 = arith.constant 0 : index
    %10 = vector.load %arg4[%c0_16, %c0_17] : memref<16x4xf32, #tpu.memory_space<vmem>>, vector<16x4xf32>
    %c0_18 = arith.constant 0 : index
    %c0_19 = arith.constant 0 : index
    %c0_20 = arith.constant 0 : index
    %11 = vector.load %arg1[%c0_18, %c0_19, %c0_20] : memref<1x4x256xf32, #tpu.memory_space<vmem>>, vector<1x4x256xf32>
    %12 = vector.shape_cast %11 : vector<1x4x256xf32> to vector<4x256xf32>
    %cst = arith.constant dense<0.000000e+00> : vector<24x256xf32>
    %13 = tpu.matmul %8, %12, %cst {dimension_numbers = #tpu.dot_dimension_numbers<[1], [0], [0], [1], [0, 0, 1, 1], [], []>} : vector<24x4xf32>, vector<4x256xf32>, vector<24x256xf32> -> vector<24x256xf32>
    %14 = vector.extract_strided_slice %13 {offsets = [0, 0], sizes = [4, 256], strides = [1, 1]} : vector<24x256xf32> to vector<4x256xf32>
    %cst_21 = arith.constant dense<0.000000e+00> : vector<4xf32>
    %15 = vector.multi_reduction <add>, %14, %cst_21 [1] : vector<4x256xf32> to vector<4xf32>
    %16 = vector.shape_cast %15 : vector<4xf32> to vector<4x1xf32>
    %17 = arith.mulf %14, %14 : vector<4x256xf32>
    %cst_22 = arith.constant dense<0.000000e+00> : vector<4xf32>
    %18 = vector.multi_reduction <add>, %17, %cst_22 [1] : vector<4x256xf32> to vector<4xf32>
    %19 = vector.shape_cast %18 : vector<4xf32> to vector<4x1xf32>
    %cst_23 = arith.constant 3.906250e-03 : f32
    %20 = vector.broadcast %cst_23 : f32 to vector<4x1xf32>
    %21 = arith.mulf %16, %20 : vector<4x1xf32>
    %cst_24 = arith.constant 3.906250e-03 : f32
    %22 = vector.broadcast %cst_24 : f32 to vector<4x1xf32>
    %23 = arith.mulf %19, %22 : vector<4x1xf32>
    %24 = arith.mulf %21, %21 : vector<4x1xf32>
    %25 = arith.subf %23, %24 : vector<4x1xf32>
    %cst_25 = arith.constant 0.000000e+00 : f32
    %26 = vector.broadcast %cst_25 : f32 to vector<4x1xf32>
    %27 = arith.maximumf %25, %26 : vector<4x1xf32>
    %cst_26 = arith.constant 9.99999974E-6 : f32
    %28 = vector.broadcast %cst_26 : f32 to vector<4x1xf32>
    %29 = arith.addf %27, %28 : vector<4x1xf32>
    %30 = math.rsqrt %29 : vector<4x1xf32>
    %31 = arith.mulf %0, %30 : vector<4x1xf32>
    %32 = arith.mulf %21, %31 : vector<4x1xf32>
    %33 = arith.subf %1, %32 : vector<4x1xf32>
    %34 = vector.broadcast %31 : vector<4x1xf32> to vector<4x256xf32>
    %35 = arith.mulf %14, %34 : vector<4x256xf32>
    %36 = vector.broadcast %33 : vector<4x1xf32> to vector<4x256xf32>
    %37 = arith.addf %35, %36 : vector<4x256xf32>
    %cst_27 = arith.constant 0.000000e+00 : f32
    %38 = vector.broadcast %cst_27 : f32 to vector<4x256xf32>
    %39 = arith.maximumf %37, %38 : vector<4x256xf32>
    %40 = vector.extract_strided_slice %13 {offsets = [8, 0], sizes = [16, 256], strides = [1, 1]} : vector<24x256xf32> to vector<16x256xf32>
    %cst_28 = arith.constant dense<0.000000e+00> : vector<16xf32>
    %41 = vector.multi_reduction <add>, %40, %cst_28 [1] : vector<16x256xf32> to vector<16xf32>
    %42 = vector.shape_cast %41 : vector<16xf32> to vector<16x1xf32>
    %43 = arith.mulf %40, %40 : vector<16x256xf32>
    %cst_29 = arith.constant dense<0.000000e+00> : vector<16xf32>
    %44 = vector.multi_reduction <add>, %43, %cst_29 [1] : vector<16x256xf32> to vector<16xf32>
    %45 = vector.shape_cast %44 : vector<16xf32> to vector<16x1xf32>
    %cst_30 = arith.constant 3.906250e-03 : f32
    %46 = vector.broadcast %cst_30 : f32 to vector<16x1xf32>
    %47 = arith.mulf %42, %46 : vector<16x1xf32>
    %cst_31 = arith.constant 3.906250e-03 : f32
    %48 = vector.broadcast %cst_31 : f32 to vector<16x1xf32>
    %49 = arith.mulf %45, %48 : vector<16x1xf32>
    %50 = arith.mulf %47, %47 : vector<16x1xf32>
    %51 = arith.subf %49, %50 : vector<16x1xf32>
    %cst_32 = arith.constant 0.000000e+00 : f32
    %52 = vector.broadcast %cst_32 : f32 to vector<16x1xf32>
    %53 = arith.maximumf %51, %52 : vector<16x1xf32>
    %cst_33 = arith.constant 9.99999974E-6 : f32
    %54 = vector.broadcast %cst_33 : f32 to vector<16x1xf32>
    %55 = arith.addf %53, %54 : vector<16x1xf32>
    %56 = math.rsqrt %55 : vector<16x1xf32>
    %57 = arith.mulf %6, %56 : vector<16x1xf32>
    %58 = arith.mulf %47, %57 : vector<16x1xf32>
    %59 = arith.subf %7, %58 : vector<16x1xf32>
    %60 = vector.broadcast %57 : vector<16x1xf32> to vector<16x256xf32>
    %61 = arith.mulf %40, %60 : vector<16x256xf32>
    %62 = vector.broadcast %59 : vector<16x1xf32> to vector<16x256xf32>
    %63 = arith.addf %61, %62 : vector<16x256xf32>
    %c17_i32 = arith.constant 17 : i32
    %64 = tpu.dynamic_rotate %39 by %c17_i32 dim 1 : vector<4x256xf32>, i32 -> vector<4x256xf32>
    %c0_34 = arith.constant 0 : index
    %c0_35 = arith.constant 0 : index
    %65 = vector.load %arg5[%c0_34, %c0_35] : memref<9x256xf32, #tpu.memory_space<vmem>>, vector<1x256xf32>
    %66 = vector.broadcast %65 : vector<1x256xf32> to vector<4x256xf32>
    %67 = arith.mulf %64, %66 : vector<4x256xf32>
    %c16_i32 = arith.constant 16 : i32
    %68 = tpu.dynamic_rotate %39 by %c16_i32 dim 1 : vector<4x256xf32>, i32 -> vector<4x256xf32>
    %c1_36 = arith.constant 1 : index
    %c0_37 = arith.constant 0 : index
    %69 = vector.load %arg5[%c1_36, %c0_37] : memref<9x256xf32, #tpu.memory_space<vmem>>, vector<1x256xf32>
    %70 = vector.broadcast %69 : vector<1x256xf32> to vector<4x256xf32>
    %71 = arith.mulf %68, %70 : vector<4x256xf32>
    %c15_i32 = arith.constant 15 : i32
    %72 = tpu.dynamic_rotate %39 by %c15_i32 dim 1 : vector<4x256xf32>, i32 -> vector<4x256xf32>
    %c2_38 = arith.constant 2 : index
    %c0_39 = arith.constant 0 : index
    %73 = vector.load %arg5[%c2_38, %c0_39] : memref<9x256xf32, #tpu.memory_space<vmem>>, vector<1x256xf32>
    %74 = vector.broadcast %73 : vector<1x256xf32> to vector<4x256xf32>
    %75 = arith.mulf %72, %74 : vector<4x256xf32>
    %c1_i32 = arith.constant 1 : i32
    %76 = tpu.dynamic_rotate %39 by %c1_i32 dim 1 : vector<4x256xf32>, i32 -> vector<4x256xf32>
    %c3_40 = arith.constant 3 : index
    %c0_41 = arith.constant 0 : index
    %77 = vector.load %arg5[%c3_40, %c0_41] : memref<9x256xf32, #tpu.memory_space<vmem>>, vector<1x256xf32>
    %78 = vector.broadcast %77 : vector<1x256xf32> to vector<4x256xf32>
    %79 = arith.mulf %76, %78 : vector<4x256xf32>
    %c255_i32 = arith.constant 255 : i32
    %80 = tpu.dynamic_rotate %39 by %c255_i32 dim 1 : vector<4x256xf32>, i32 -> vector<4x256xf32>
    %c5 = arith.constant 5 : index
    %c0_42 = arith.constant 0 : index
    %81 = vector.load %arg5[%c5, %c0_42] : memref<9x256xf32, #tpu.memory_space<vmem>>, vector<1x256xf32>
    %82 = vector.broadcast %81 : vector<1x256xf32> to vector<4x256xf32>
    %83 = arith.mulf %80, %82 : vector<4x256xf32>
    %c241_i32 = arith.constant 241 : i32
    %84 = tpu.dynamic_rotate %39 by %c241_i32 dim 1 : vector<4x256xf32>, i32 -> vector<4x256xf32>
    %c6 = arith.constant 6 : index
    %c0_43 = arith.constant 0 : index
    %85 = vector.load %arg5[%c6, %c0_43] : memref<9x256xf32, #tpu.memory_space<vmem>>, vector<1x256xf32>
    %86 = vector.broadcast %85 : vector<1x256xf32> to vector<4x256xf32>
    %87 = arith.mulf %84, %86 : vector<4x256xf32>
    %c240_i32 = arith.constant 240 : i32
    %88 = tpu.dynamic_rotate %39 by %c240_i32 dim 1 : vector<4x256xf32>, i32 -> vector<4x256xf32>
    %c7 = arith.constant 7 : index
    %c0_44 = arith.constant 0 : index
    %89 = vector.load %arg5[%c7, %c0_44] : memref<9x256xf32, #tpu.memory_space<vmem>>, vector<1x256xf32>
    %90 = vector.broadcast %89 : vector<1x256xf32> to vector<4x256xf32>
    %91 = arith.mulf %88, %90 : vector<4x256xf32>
    %c239_i32 = arith.constant 239 : i32
    %92 = tpu.dynamic_rotate %39 by %c239_i32 dim 1 : vector<4x256xf32>, i32 -> vector<4x256xf32>
    %c8 = arith.constant 8 : index
    %c0_45 = arith.constant 0 : index
    %93 = vector.load %arg5[%c8, %c0_45] : memref<9x256xf32, #tpu.memory_space<vmem>>, vector<1x256xf32>
    %94 = vector.broadcast %93 : vector<1x256xf32> to vector<4x256xf32>
    %95 = arith.mulf %92, %94 : vector<4x256xf32>
    %96 = tpu.concatenate %67, %71, %75, %79, %39, %83, %87, %91, %95 in 0 : vector<4x256xf32>, vector<4x256xf32>, vector<4x256xf32>, vector<4x256xf32>, vector<4x256xf32>, vector<4x256xf32>, vector<4x256xf32>, vector<4x256xf32>, vector<4x256xf32> -> vector<36x256xf32>
    %cst_46 = arith.constant dense<0.000000e+00> : vector<4x256xf32>
    %97 = tpu.matmul %9, %96, %cst_46 {dimension_numbers = #tpu.dot_dimension_numbers<[1], [0], [0], [1], [0, 0, 1, 1], [], []>} : vector<4x36xf32>, vector<36x256xf32>, vector<4x256xf32> -> vector<4x256xf32>
    %cst_47 = arith.constant dense<0.000000e+00> : vector<4xf32>
    %98 = vector.multi_reduction <add>, %97, %cst_47 [1] : vector<4x256xf32> to vector<4xf32>
    %99 = vector.shape_cast %98 : vector<4xf32> to vector<4x1xf32>
    %100 = arith.mulf %97, %97 : vector<4x256xf32>
    %cst_48 = arith.constant dense<0.000000e+00> : vector<4xf32>
    %101 = vector.multi_reduction <add>, %100, %cst_48 [1] : vector<4x256xf32> to vector<4xf32>
    %102 = vector.shape_cast %101 : vector<4xf32> to vector<4x1xf32>
    %cst_49 = arith.constant 3.906250e-03 : f32
    %103 = vector.broadcast %cst_49 : f32 to vector<4x1xf32>
    %104 = arith.mulf %99, %103 : vector<4x1xf32>
    %cst_50 = arith.constant 3.906250e-03 : f32
    %105 = vector.broadcast %cst_50 : f32 to vector<4x1xf32>
    %106 = arith.mulf %102, %105 : vector<4x1xf32>
    %107 = arith.mulf %104, %104 : vector<4x1xf32>
    %108 = arith.subf %106, %107 : vector<4x1xf32>
    %cst_51 = arith.constant 0.000000e+00 : f32
    %109 = vector.broadcast %cst_51 : f32 to vector<4x1xf32>
    %110 = arith.maximumf %108, %109 : vector<4x1xf32>
    %cst_52 = arith.constant 9.99999974E-6 : f32
    %111 = vector.broadcast %cst_52 : f32 to vector<4x1xf32>
    %112 = arith.addf %110, %111 : vector<4x1xf32>
    %113 = math.rsqrt %112 : vector<4x1xf32>
    %114 = arith.mulf %2, %113 : vector<4x1xf32>
    %115 = arith.mulf %104, %114 : vector<4x1xf32>
    %116 = arith.subf %3, %115 : vector<4x1xf32>
    %117 = vector.broadcast %114 : vector<4x1xf32> to vector<4x256xf32>
    %118 = arith.mulf %97, %117 : vector<4x256xf32>
    %119 = vector.broadcast %116 : vector<4x1xf32> to vector<4x256xf32>
    %120 = arith.addf %118, %119 : vector<4x256xf32>
    %cst_53 = arith.constant 0.000000e+00 : f32
    %121 = vector.broadcast %cst_53 : f32 to vector<4x256xf32>
    %122 = arith.maximumf %120, %121 : vector<4x256xf32>
    %cst_54 = arith.constant dense<0.000000e+00> : vector<16x256xf32>
    %123 = tpu.matmul %10, %122, %cst_54 {dimension_numbers = #tpu.dot_dimension_numbers<[1], [0], [0], [1], [0, 0, 1, 1], [], []>} : vector<16x4xf32>, vector<4x256xf32>, vector<16x256xf32> -> vector<16x256xf32>
    %cst_55 = arith.constant dense<0.000000e+00> : vector<16xf32>
    %124 = vector.multi_reduction <add>, %123, %cst_55 [1] : vector<16x256xf32> to vector<16xf32>
    %125 = vector.shape_cast %124 : vector<16xf32> to vector<16x1xf32>
    %126 = arith.mulf %123, %123 : vector<16x256xf32>
    %cst_56 = arith.constant dense<0.000000e+00> : vector<16xf32>
    %127 = vector.multi_reduction <add>, %126, %cst_56 [1] : vector<16x256xf32> to vector<16xf32>
    %128 = vector.shape_cast %127 : vector<16xf32> to vector<16x1xf32>
    %cst_57 = arith.constant 3.906250e-03 : f32
    %129 = vector.broadcast %cst_57 : f32 to vector<16x1xf32>
    %130 = arith.mulf %125, %129 : vector<16x1xf32>
    %cst_58 = arith.constant 3.906250e-03 : f32
    %131 = vector.broadcast %cst_58 : f32 to vector<16x1xf32>
    %132 = arith.mulf %128, %131 : vector<16x1xf32>
    %133 = arith.mulf %130, %130 : vector<16x1xf32>
    %134 = arith.subf %132, %133 : vector<16x1xf32>
    %cst_59 = arith.constant 0.000000e+00 : f32
    %135 = vector.broadcast %cst_59 : f32 to vector<16x1xf32>
    %136 = arith.maximumf %134, %135 : vector<16x1xf32>
    %cst_60 = arith.constant 9.99999974E-6 : f32
    %137 = vector.broadcast %cst_60 : f32 to vector<16x1xf32>
    %138 = arith.addf %136, %137 : vector<16x1xf32>
    %139 = math.rsqrt %138 : vector<16x1xf32>
    %140 = arith.mulf %4, %139 : vector<16x1xf32>
    %141 = arith.mulf %130, %140 : vector<16x1xf32>
    %142 = arith.subf %5, %141 : vector<16x1xf32>
    %143 = vector.broadcast %140 : vector<16x1xf32> to vector<16x256xf32>
    %144 = arith.mulf %123, %143 : vector<16x256xf32>
    %145 = vector.broadcast %142 : vector<16x1xf32> to vector<16x256xf32>
    %146 = arith.addf %144, %145 : vector<16x256xf32>
    %147 = arith.addf %146, %63 : vector<16x256xf32>
    %cst_61 = arith.constant 0.000000e+00 : f32
    %148 = vector.broadcast %cst_61 : f32 to vector<16x256xf32>
    %149 = arith.maximumf %147, %148 : vector<16x256xf32>
    %c0_62 = arith.constant 0 : index
    %c0_63 = arith.constant 0 : index
    %c0_64 = arith.constant 0 : index
    %150 = vector.load %arg8[%c0_62, %c0_63, %c0_64] : memref<1x16x256xf32, #tpu.memory_space<vmem>>, vector<1x16x256xf32>
    %151 = vector.shape_cast %150 : vector<1x16x256xf32> to vector<16x256xf32>
    %152 = vector.shape_cast %149 : vector<16x256xf32> to vector<1x16x256xf32>
    tpu.vector_store %arg8[%c0_62, %c0_63, %c0_64], %152 {strides = array<i32>} : memref<1x16x256xf32, #tpu.memory_space<vmem>>, vector<1x16x256xf32>,
    return
  }
  func.func @transform_0(%arg0: i32) -> (i32, i32, i32) {
    %c0_i32 = arith.constant 0 : i32
    %c0_i32_0 = arith.constant 0 : i32
    %c0_i32_1 = arith.constant 0 : i32
    return %arg0, %c0_i32, %c0_i32_0 : i32, i32, i32
  }
  func.func @transform_1(%arg0: i32) -> (i32, i32) {
    %c0_i32 = arith.constant 0 : i32
    %c0_i32_0 = arith.constant 0 : i32
    %c0_i32_1 = arith.constant 0 : i32
    return %c0_i32, %c0_i32_0 : i32, i32
  }
  func.func @transform_2(%arg0: i32) -> (i32, i32) {
    %c0_i32 = arith.constant 0 : i32
    %c0_i32_0 = arith.constant 0 : i32
    %c0_i32_1 = arith.constant 0 : i32
    return %c0_i32, %c0_i32_0 : i32, i32
  }
  func.func @transform_3(%arg0: i32) -> (i32, i32) {
    %c0_i32 = arith.constant 0 : i32
    %c0_i32_0 = arith.constant 0 : i32
    %c0_i32_1 = arith.constant 0 : i32
    return %c0_i32, %c0_i32_0 : i32, i32
  }
  func.func @transform_4(%arg0: i32) -> (i32, i32) {
    %c0_i32 = arith.constant 0 : i32
    %c0_i32_0 = arith.constant 0 : i32
    %c0_i32_1 = arith.constant 0 : i32
    return %c0_i32, %c0_i32_0 : i32, i32
  }
  func.func @transform_5(%arg0: i32) -> (i32, i32) {
    %c0_i32 = arith.constant 0 : i32
    %c0_i32_0 = arith.constant 0 : i32
    %c0_i32_1 = arith.constant 0 : i32
    return %c0_i32, %c0_i32_0 : i32, i32
  }
  func.func @transform_6(%arg0: i32) -> (i32, i32) {
    %c0_i32 = arith.constant 0 : i32
    %c0_i32_0 = arith.constant 0 : i32
    %c0_i32_1 = arith.constant 0 : i32
    return %c0_i32, %c0_i32_0 : i32, i32
  }
  func.func @transform_7(%arg0: i32) -> (i32, i32, i32) {
    %c0_i32 = arith.constant 0 : i32
    %c0_i32_0 = arith.constant 0 : i32
    %c0_i32_1 = arith.constant 0 : i32
    return %arg0, %c0_i32, %c0_i32_0 : i32, i32, i32
  }
}

</mosaic_0001>

<llo_original>
// kernel: tpu_custom_call.1
$region0: #{tpu_custom_call.1}
  #allocation0 [shape = 'u32[]', space=smem, size = 0x4, offset = 0x4, fixed_abs, tag = 'smem constant byte address 0x4 - core index']
  #allocation1 [shape = 'u32[144,128]{1,0:T(1,128)}', space=vmem, size = 0x12000, scoped, tag = 'internal scratch']
  %s0 = inlined_call_operand.vmem [shape: f32[2,4,256], index: 0, kind: input, shape index: {}]
  %s1 = inlined_call_operand.vmem [shape: f32[24,4], index: 1, kind: input, shape index: {}]
  %s2 = inlined_call_operand.vmem [shape: f32[4,36], index: 2, kind: input, shape index: {}]
  %s3 = inlined_call_operand.vmem [shape: f32[16,4], index: 3, kind: input, shape index: {}]
  %s4 = inlined_call_operand.vmem [shape: f32[9,256], index: 4, kind: input, shape index: {}]
  %s5 = inlined_call_operand.vmem [shape: f32[4,4], index: 5, kind: input, shape index: {}]
  %s6 = inlined_call_operand.vmem [shape: f32[16,4], index: 6, kind: input, shape index: {}]
  %s7 = inlined_call_operand.hbm [shape: f32[2,16,256], index: 7, kind: output, shape index: {}]
  %s8 = sld [smem:[#allocation0]]
  $region61: #{tpu_custom_call.1} parent=0
    _
  %s10 = ssub.s32 1, %s8
  %s11 = scalar_select 0, %s10, %s8
  $region1: #{tpu_custom_call.1} parent=0
    #allocation2 [shape = 'u8[32768]{0}', space=vmem, size = 0x8000, scoped, tag = 'output window, operand 0']
    #allocation3 [shape = 's32[2]{0}', space=sflag, size = 0x8, scoped, tag = 'scoped memory for tpu_custom_call.1']
    %12 = vsyncpa [#allocation3], 0
    %s13 = scalar_lea.sflag [#allocation3], 1
    %14 = vsyncpa %s13, 0
    loop: start=0, step=1, limit=4
    $region2: #{tpu_custom_call.1} parent=1 // loop_pre_header
      _
    $region3: #{tpu_custom_call.1} parent=1 // loop_header
      %s16 = sphi 0, %s20
      %p17 = scmp.ge.s32.totalorder %s16, 4
      %s26 = sphi 0, %s28
      %s29 = sphi 0, %s26
      %s30 = sphi 0, %s29
      %s46 = sphi 0, %s30
      %s50 = sphi 0, %s50
      %s52 = sphi 0, %s50
      %s53 = sphi 0, %s52
      %s67 = sphi 0, %s53
      %s71 = sphi 0, %s71
      %s73 = sphi 0, %s71
      %s74 = sphi 0, %s73
      %s88 = sphi 0, %s74
      %s92 = sphi 0, %s92
      %s94 = sphi 0, %s92
      %s95 = sphi 0, %s94
      %s109 = sphi 0, %s95
      %s113 = sphi 0, %s113
      %s115 = sphi 0, %s113
      %s116 = sphi 0, %s115
      %s130 = sphi 0, %s116
      %s134 = sphi 0, %s134
      %s136 = sphi 0, %s134
      %s137 = sphi 0, %s136
      %s151 = sphi 0, %s137
      %s155 = sphi 0, %s155
      %s157 = sphi 0, %s155
      %s158 = sphi 0, %s157
      %s172 = sphi 0, %s158
      %s178 = sphi 0, %s180
      %s181 = sphi 0, %s178
      %s182 = sphi 0, %s181
      %s198 = sphi 0, %s182
    $region4: #{tpu_custom_call.1} parent=1 // loop_header_branch
      %19 = sbr.rel (%p17) target = $region8
    $region5: #{tpu_custom_call.1} parent=1 // loop_body
      %s21 = ssub.s32 %s16, 1
      %s22 = ssub.s32 %s16, 2
      %s23 = sadd.s32 %s16, 1
      %s24 = ssub.s32 %s16, %s23
      %p25 = scmp.eq.s32.totalorder %s24, 0
      %s27 = sadd.s32 %s26, 1
      %s28 = scalar_select %p25, %s26, %s27
      %p31 = pneg %p25
      %p32 = scmp.eq.s32.totalorder %s16, 1
      %p33 = por %p31, %p32
      %p34 = scmp.ne.s32.totalorder %s26, %s29
      %p35 = scmp.eq.s32.totalorder %s16, 0
      %p36 = por %p34, %p35
      %p37 = scmp.ne.s32.totalorder %s26, %s29
      %p38 = scmp.eq.s32.totalorder %s21, 1
      %p39 = por %p37, %p38
      %p40 = scmp.ne.s32.totalorder %s29, %s30
      %p41 = scmp.eq.s32.totalorder %s21, 0
      %p42 = por %p40, %p41
      %p43 = scmp.ne.s32.totalorder %s29, %s30
      %p44 = scmp.eq.s32.totalorder %s22, 1
      %p45 = por %p43, %p44
      %p47 = scmp.ne.s32.totalorder %s30, %s46
      %p48 = scmp.eq.s32.totalorder %s22, 0
      %p49 = por %p47, %p48
      %s51 = sadd.s32 %s50, 1
      %p54 = scmp.eq.s32.totalorder %s16, 1
      %p55 = scmp.ne.s32.totalorder %s50, %s52
      %p56 = scmp.eq.s32.totalorder %s16, 0
      %p57 = por %p55, %p56
      %p58 = scmp.ne.s32.totalorder %s50, %s52
      %p59 = scmp.eq.s32.totalorder %s21, 1
      %p60 = por %p58, %p59
      %p61 = scmp.ne.s32.totalorder %s52, %s53
      %p62 = scmp.eq.s32.totalorder %s21, 0
      %p63 = por %p61, %p62
      %p64 = scmp.ne.s32.totalorder %s52, %s53
      %p65 = scmp.eq.s32.totalorder %s22, 1
      %p66 = por %p64, %p65
      %p68 = scmp.ne.s32.totalorder %s53, %s67
      %p69 = scmp.eq.s32.totalorder %s22, 0
      %p70 = por %p68, %p69
      %s72 = sadd.s32 %s71, 1
      %p75 = scmp.eq.s32.totalorder %s16, 1
      %p76 = scmp.ne.s32.totalorder %s71, %s73
      %p77 = scmp.eq.s32.totalorder %s16, 0
      %p78 = por %p76, %p77
      %p79 = scmp.ne.s32.totalorder %s71, %s73
      %p80 = scmp.eq.s32.totalorder %s21, 1
      %p81 = por %p79, %p80
      %p82 = scmp.ne.s32.totalorder %s73, %s74
      %p83 = scmp.eq.s32.totalorder %s21, 0
      %p84 = por %p82, %p83
      %p85 = scmp.ne.s32.totalorder %s73, %s74
      %p86 = scmp.eq.s32.totalorder %s22, 1
      %p87 = por %p85, %p86
      %p89 = scmp.ne.s32.totalorder %s74, %s88
      %p90 = scmp.eq.s32.totalorder %s22, 0
      %p91 = por %p89, %p90
      %s93 = sadd.s32 %s92, 1
      %p96 = scmp.eq.s32.totalorder %s16, 1
      %p97 = scmp.ne.s32.totalorder %s92, %s94
      %p98 = scmp.eq.s32.totalorder %s16, 0
      %p99 = por %p97, %p98
      %p100 = scmp.ne.s32.totalorder %s92, %s94
      %p101 = scmp.eq.s32.totalorder %s21, 1
      %p102 = por %p100, %p101
      %p103 = scmp.ne.s32.totalorder %s94, %s95
      %p104 = scmp.eq.s32.totalorder %s21, 0
      %p105 = por %p103, %p104
      %p106 = scmp.ne.s32.totalorder %s94, %s95
      %p107 = scmp.eq.s32.totalorder %s22, 1
      %p108 = por %p106, %p107
      %p110 = scmp.ne.s32.totalorder %s95, %s109
      %p111 = scmp.eq.s32.totalorder %s22, 0
      %p112 = por %p110, %p111
      %s114 = sadd.s32 %s113, 1
      %p117 = scmp.eq.s32.totalorder %s16, 1
      %p118 = scmp.ne.s32.totalorder %s113, %s115
      %p119 = scmp.eq.s32.totalorder %s16, 0
      %p120 = por %p118, %p119
      %p121 = scmp.ne.s32.totalorder %s113, %s115
      %p122 = scmp.eq.s32.totalorder %s21, 1
      %p123 = por %p121, %p122
      %p124 = scmp.ne.s32.totalorder %s115, %s116
      %p125 = scmp.eq.s32.totalorder %s21, 0
      %p126 = por %p124, %p125
      %p127 = scmp.ne.s32.totalorder %s115, %s116
      %p128 = scmp.eq.s32.totalorder %s22, 1
      %p129 = por %p127, %p128
      %p131 = scmp.ne.s32.totalorder %s116, %s130
      %p132 = scmp.eq.s32.totalorder %s22, 0
      %p133 = por %p131, %p132
      %s135 = sadd.s32 %s134, 1
      %p138 = scmp.eq.s32.totalorder %s16, 1
      %p139 = scmp.ne.s32.totalorder %s134, %s136
      %p140 = scmp.eq.s32.totalorder %s16, 0
      %p141 = por %p139, %p140
      %p142 = scmp.ne.s32.totalorder %s134, %s136
      %p143 = scmp.eq.s32.totalorder %s21, 1
      %p144 = por %p142, %p143
      %p145 = scmp.ne.s32.totalorder %s136, %s137
      %p146 = scmp.eq.s32.totalorder %s21, 0
      %p147 = por %p145, %p146
      %p148 = scmp.ne.s32.totalorder %s136, %s137
      %p149 = scmp.eq.s32.totalorder %s22, 1
      %p150 = por %p148, %p149
      %p152 = scmp.ne.s32.totalorder %s137, %s151
      %p153 = scmp.eq.s32.totalorder %s22, 0
      %p154 = por %p152, %p153
      %s156 = sadd.s32 %s155, 1
      %p159 = scmp.eq.s32.totalorder %s16, 1
      %p160 = scmp.ne.s32.totalorder %s155, %s157
      %p161 = scmp.eq.s32.totalorder %s16, 0
      %p162 = por %p160, %p161
      %p163 = scmp.ne.s32.totalorder %s155, %s157
      %p164 = scmp.eq.s32.totalorder %s21, 1
      %p165 = por %p163, %p164
      %p166 = scmp.ne.s32.totalorder %s157, %s158
      %p167 = scmp.eq.s32.totalorder %s21, 0
      %p168 = por %p166, %p167
      %p169 = scmp.ne.s32.totalorder %s157, %s158
      %p170 = scmp.eq.s32.totalorder %s22, 1
      %p171 = por %p169, %p170
      %p173 = scmp.ne.s32.totalorder %s158, %s172
      %p174 = scmp.eq.s32.totalorder %s22, 0
      %p175 = por %p173, %p174
      %s176 = ssub.s32 %s16, %s23
      %p177 = scmp.eq.s32.totalorder %s176, 0
      %s179 = sadd.s32 %s178, 1
      %s180 = scalar_select %p177, %s178, %s179
      %p183 = pneg %p177
      %p184 = scmp.eq.s32.totalorder %s16, 1
      %p185 = por %p183, %p184
      %p186 = scmp.ne.s32.totalorder %s178, %s181
      %p187 = scmp.eq.s32.totalorder %s16, 0
      %p188 = por %p186, %p187
      %p189 = scmp.ne.s32.totalorder %s178, %s181
      %p190 = scmp.eq.s32.totalorder %s21, 1
      %p191 = por %p189, %p190
      %p192 = scmp.ne.s32.totalorder %s181, %s182
      %p193 = scmp.eq.s32.totalorder %s21, 0
      %p194 = por %p192, %p193
      %p195 = scmp.ne.s32.totalorder %s181, %s182
      %p196 = scmp.eq.s32.totalorder %s22, 1
      %p197 = por %p195, %p196
      %p199 = scmp.ne.s32.totalorder %s182, %s198
      %p200 = scmp.eq.s32.totalorder %s22, 0
      %p201 = por %p199, %p200
      %p202 = scmp.le.s32.totalorder 1, %s16
      %p203 = scmp.lt.s32.totalorder %s16, 3
      %p204 = pnand %p202, %p203
      %p205 = pneg %p204
      // Predicated region
      $region9: #{tpu_custom_call.1} parent=5 // pred_check
        _
      $region10: #{tpu_custom_call.1} parent=5 // pred_check_branch
        %207 = sbr.rel (%p204) target = $region12
      $region11: #{tpu_custom_call.1} parent=5 // pred_region
        %s208 = ssub.s32 %s16, 1
        // Predicated region
        $region13: #{tpu_custom_call.1} parent=11 // pred_check
          %p209 = pneg %p63
        $region14: #{tpu_custom_call.1} parent=11 // pred_check_branch
          %211 = sbr.rel (%p209) target = $region16
        $region15: #{tpu_custom_call.1} parent=11 // pred_region
          _
        $region16: #{tpu_custom_call.1} parent=11 // pred_fallthru
          _
        // Predicated region
        $region17: #{tpu_custom_call.1} parent=11 // pred_check
          %p212 = pneg %p84
        $region18: #{tpu_custom_call.1} parent=11 // pred_check_branch
          %214 = sbr.rel (%p212) target = $region20
        $region19: #{tpu_custom_call.1} parent=11 // pred_region
          _
        $region20: #{tpu_custom_call.1} parent=11 // pred_fallthru
          _
        // Predicated region
        $region21: #{tpu_custom_call.1} parent=11 // pred_check
          %p215 = pneg %p105
        $region22: #{tpu_custom_call.1} parent=11 // pred_check_branch
          %217 = sbr.rel (%p215) target = $region24
        $region23: #{tpu_custom_call.1} parent=11 // pred_region
          _
        $region24: #{tpu_custom_call.1} parent=11 // pred_fallthru
          _
        // Predicated region
        $region25: #{tpu_custom_call.1} parent=11 // pred_check
          %p218 = pneg %p126
        $region26: #{tpu_custom_call.1} parent=11 // pred_check_branch
          %220 = sbr.rel (%p218) target = $region28
        $region27: #{tpu_custom_call.1} parent=11 // pred_region
          _
        $region28: #{tpu_custom_call.1} parent=11 // pred_fallthru
          _
        // Predicated region
        $region29: #{tpu_custom_call.1} parent=11 // pred_check
          %p221 = pneg %p147
        $region30: #{tpu_custom_call.1} parent=11 // pred_check_branch
          %223 = sbr.rel (%p221) target = $region32
        $region31: #{tpu_custom_call.1} parent=11 // pred_region
          _
        $region32: #{tpu_custom_call.1} parent=11 // pred_fallthru
          _
        // Predicated region
        $region33: #{tpu_custom_call.1} parent=11 // pred_check
          %p224 = pneg %p168
        $region34: #{tpu_custom_call.1} parent=11 // pred_check_branch
          %226 = sbr.rel (%p224) target = $region36
        $region35: #{tpu_custom_call.1} parent=11 // pred_region
          _
        $region36: #{tpu_custom_call.1} parent=11 // pred_fallthru
          _
      $region12: #{tpu_custom_call.1} parent=5 // pred_fallthru
        _
      %p227 = scmp.lt.s32.totalorder %s16, 2
      // Predicated region
      $region37: #{tpu_custom_call.1} parent=5 // pred_check
        %p228 = pneg %p227
      $region38: #{tpu_custom_call.1} parent=5 // pred_check_branch
        %230 = sbr.rel (%p228) target = $region40
      $region39: #{tpu_custom_call.1} parent=5 // pred_region
        // Predicated region
        $region41: #{tpu_custom_call.1} parent=39 // pred_check
          %p231 = pneg %p36
        $region42: #{tpu_custom_call.1} parent=39 // pred_check_branch
          %233 = sbr.rel (%p231) target = $region44
        $region43: #{tpu_custom_call.1} parent=39 // pred_region
          %p234 = scmp.lt.s32.totalorder %s16, 1
          %s235 = scalar_select %p234, %s16, 1
          %s236 = smul.addr %s235, 2
          %s237 = smul.addr %s236, 4
          %s238 = scalar_lea.vmem %s0, %s237
        $region44: #{tpu_custom_call.1} parent=39 // pred_fallthru
          _
      $region40: #{tpu_custom_call.1} parent=5 // pred_fallthru
        _
      %p239 = scmp.le.s32.totalorder 1, %s16
      %p240 = scmp.lt.s32.totalorder %s16, 3
      %p241 = pnand %p239, %p240
      %p242 = pneg %p241
      // Predicated region
      $region45: #{tpu_custom_call.1} parent=5 // pred_check
        _
      $region46: #{tpu_custom_call.1} parent=5 // pred_check_branch
        %244 = sbr.rel (%p241) target = $region48
      $region47: #{tpu_custom_call.1} parent=5 // pred_region
        %s245 = ssub.s32 %s16, 1
        %p246 = scmp.lt.s32.totalorder %s21, 1
        %s247 = scalar_select %p246, %s21, 1
        %s248 = smul.addr %s247, 2
        %s249 = smul.addr %s248, 4
        %s250 = scalar_lea.vmem %s0, %s249
        %p251 = pneg %p42
        %p252 = pneg %p39
        %p253 = pneg %p63
        %p254 = pneg %p60
        %p255 = pneg %p84
        %p256 = pneg %p81
        %p257 = pneg %p105
        %p258 = pneg %p102
        %p259 = pneg %p126
        %p260 = pneg %p123
        %p261 = pneg %p147
        %p262 = pneg %p144
        %p263 = pneg %p168
        %p264 = pneg %p165
        %p265 = pneg %p194
        %p266 = pneg %p191
        %s267 = sand.u32 %s181, 1
        %s268 = scalar_lea.sflag [#allocation3], %s267
        %s269 = sand.u32 %s181, 1
        %s270 = smul.addr %s269, 32
        %s271 = scalar_lea.vmem [#allocation2], %s270
        %p272 = scmp.lt.s32.totalorder %s21, 1
        %s273 = scalar_select %p272, %s21, 1
        %s274 = smul.addr %s273, 2
        %s275 = smul.addr %s274, 4
        %s276 = scalar_lea.vmem %s0, %s275
        %v277 = vld [vmem:[%s5] sm:$0xf]
        %v278 = vld [vmem:[%s6] sm:$0xff]
        %v279 = vld [vmem:[%s6 + $0x8] sm:$0xff]
        %v280 = vld [vmem:[%s1] sm:$0xff]
        %v281 = vld [vmem:[%s1 + $0x8] sm:$0xff]
        %v282 = vld [vmem:[%s1 + $0x10] sm:$0xff]
        %v283 = vld [vmem:[%s2] sm:$0xf]
        %v284 = vld [vmem:[%s3] sm:$0xff]
        %v285 = vld [vmem:[%s3 + $0x8] sm:$0xff]
        %v286 = vld [vmem:[%s276] sm:$0xff]
        %v288 = vcombine.high %v286, %v286
        %vm289 = vcmask 31744
        %v291 = vsel %vm289, %v280, 0
        %v294 = vsel %vm289, %v281, 0
        %v297 = vsel %vm289, %v282, 0
        %vm299 = vcmask 1043456
        %v300 = vsel %vm299, %v286, 0
        %v302 = vsel %vm299, %v288, 0
        %304 = vmatprep.subr.mxu0 0.0
        %305 = vmatpush1.msra.mxu0 0.0
        %306 = vmatprep.subr.mxu0 0.0
        %307 = vmatpush1.msra.mxu0 0.0
        %308 = vmatprep.subr.mxu0 0.0
        %309 = vmatpush1.msra.mxu0 0.0
        %310 = vmatprep.subr.mxu0 0.0
        %311 = vmatpush1.msra.mxu0 0.0
        %312 = vmatprep.subr.mxu0 0.0
        %313 = vmatpush1.msra.mxu0 0.0
        %314 = vmatprep.subr.mxu0 0.0
        %315 = vmatpush1.msra.mxu0 0.0
        %316 = vmatprep.subr.mxu0 0.0
        %317 = vmatpush1.msra.mxu0 0.0
        %318 = vmatprep.subr.mxu0 0.0
        %319 = vmatpush1.msra.mxu0 0.0
        %320 = vmatprep.subr.mxu0 0.0
        %321 = vmatpush1.msra.mxu0 0.0
        %322 = vmatprep.subr.mxu0 0.0
        %323 = vmatpush1.msra.mxu0 0.0
        %324 = vmatprep.subr.mxu0 0.0
        %325 = vmatpush1.msra.mxu0 0.0
        %326 = vmatprep.subr.mxu0 0.0
        %327 = vmatpush1.msra.mxu0 0.0
        %328 = vmatprep.subr.mxu0 0.0
        %329 = vmatpush1.msra.mxu0 0.0
        %330 = vmatprep.subr.mxu0 0.0
        %331 = vmatpush1.msra.mxu0 0.0
        %332 = vmatprep.subr.mxu0 0.0
        %333 = vmatpush1.msra.mxu0 0.0
        %334 = vmatprep.subr.mxu0 %v302
        %335 = vmatpush1.msra.mxu0 %v300
        %336 = vmatprep.subr.mxu0 0.0
        %337 = vmatpush2.msra.mxu0 0.0
        %338 = vmatprep.subr.mxu0 0.0
        %339 = vmatpush2.msra.mxu0 0.0
        %340 = vmatprep.subr.mxu0 0.0
        %341 = vmatpush2.msra.mxu0 0.0
        %342 = vmatprep.subr.mxu0 0.0
        %343 = vmatpush2.msra.mxu0 0.0
        %344 = vmatprep.subr.mxu0 0.0
        %345 = vmatpush2.msra.mxu0 0.0
        %346 = vmatprep.subr.mxu0 0.0
        %347 = vmatpush2.msra.mxu0 0.0
        %348 = vmatprep.subr.mxu0 0.0
        %349 = vmatpush2.msra.mxu0 0.0
        %350 = vmatprep.subr.mxu0 0.0
        %351 = vmatpush2.msra.mxu0 0.0
        %352 = vmatprep.subr.mxu0 0.0
        %353 = vmatpush2.msra.mxu0 0.0
        %354 = vmatprep.subr.mxu0 0.0
        %355 = vmatpush2.msra.mxu0 0.0
        %356 = vmatprep.subr.mxu0 0.0
        %357 = vmatpush2.msra.mxu0 0.0
        %358 = vmatprep.subr.mxu0 0.0
        %359 = vmatpush2.msra.mxu0 0.0
        %360 = vmatprep.subr.mxu0 0.0
        %361 = vmatpush2.msra.mxu0 0.0
        %362 = vmatprep.subr.mxu0 0.0
        %363 = vmatpush2.msra.mxu0 0.0
        %364 = vmatprep.subr.mxu0 0.0
        %365 = vmatpush2.msra.mxu0 0.0
        %366 = vmatprep.subr.mxu0 0.0
        %367 = vmatpush2.msra.mxu0 0.0
        %368 = vmatprep.mubr.f32.mxu0 0.0
        %369 = vmatmul.mubr.f32.gmra.mxu0 %v291
        %v370 = vpop.f32.mrf.mxu0
        %v371 = vadd.f32 0.0, %v370
        %v372 = vpop.f32.mrf.mxu0
        %v373 = vadd.f32 0.0, %v372
        %374 = vmatprep.mubr.f32.mxu0 0.0
        %375 = vmatmul.mubr.f32.gmra.mxu0 %v294
        %v376 = vpop.f32.mrf.mxu0
        %v377 = vadd.f32 0.0, %v376
        %v378 = vpop.f32.mrf.mxu0
        %v379 = vadd.f32 0.0, %v378
        %380 = vmatprep.mubr.f32.mxu0 0.0
        %381 = vmatmul.mubr.f32.gmra.mxu0 %v297
        %v382 = vpop.f32.mrf.mxu0
        %v383 = vadd.f32 0.0, %v382
        %v384 = vpop.f32.mrf.mxu0
        %v385 = vadd.f32 0.0, %v384
        %386 = vdwg.mxu0
        %v387 = vsel %vm299, %v371, 0.0
        %v388 = vsel %vm299, %v373, 0.0
        %v389 = vadd.f32 %v387, %v388
        %390 = vadd.xlane.f32.xlu0 %v389
        %v391 = vpop.xlane.xlu0 %390
        %v392 = vmul.f32 %v371, %v371
        %v393 = vmul.f32 %v373, %v373
        %v394 = vsel %vm299, %v392, 0.0
        %v395 = vsel %vm299, %v393, 0.0
        %v396 = vadd.f32 %v394, %v395
        %397 = vadd.xlane.f32.xlu0 %v396
        %v398 = vpop.xlane.xlu0 %397
        %v399 = vmul.f32 %v391, 0.00390625
        %v400 = vmul.f32 %v398, 0.00390625
        %v401 = vmul.f32 %v399, %v399
        %v402 = vsub.f32 %v400, %v401
        %v403 = vmax.f32 %v402, 0.0
        %v404 = vadd.f32 %v403, 1e-05
        %v405 = vrsqrt.pop %v404
        %v406 = vmul.f32 %v277, %v405
        %v407 = vmul.f32 %v399, %v406
        %409 = vrot.lane.b32.xlu0 %v407, 1
        %v410 = vpop.permute.xlu0 %409
        %v412 = vsub.f32 %v277, %v410
        %414 = vset.pattern.permute.xlu0 0
        %415 = vperm.xlu0 %414, %v406
        %v416 = vpop.permute.xlu0 %415
        %v418 = vmul.f32 %v371, %v416
        %v419 = vmul.f32 %v373, %v416
        %421 = vset.pattern.permute.xlu0 1
        %422 = vperm.xlu0 %421, %v412
        %v423 = vpop.permute.xlu0 %422
        %v425 = vadd.f32 %v418, %v423
        %v426 = vadd.f32 %v419, %v423
        %v427 = vmax.f32 %v425, 0.0
        %v428 = vmax.f32 %v426, 0.0
        %v429 = vadd.f32 %v377, %v379
        %430 = vadd.xlane.f32.xlu0 %v429
        %v431 = vpop.xlane.xlu0 %430
        %v432 = vadd.f32 %v383, %v385
        %433 = vadd.xlane.f32.xlu0 %v432
        %v434 = vpop.xlane.xlu0 %433
        %v435 = vmul.f32 %v377, %v377
        %v436 = vmul.f32 %v379, %v379
        %v437 = vmul.f32 %v383, %v383
        %v438 = vmul.f32 %v385, %v385
        %v439 = vadd.f32 %v435, %v436
        %440 = vadd.xlane.f32.xlu0 %v439
        %v441 = vpop.xlane.xlu0 %440
        %v442 = vadd.f32 %v437, %v438
        %443 = vadd.xlane.f32.xlu0 %v442
        %v444 = vpop.xlane.xlu0 %443
        %v445 = vmul.f32 %v431, 0.00390625
        %v446 = vmul.f32 %v434, 0.00390625
        %v447 = vmul.f32 %v441, 0.00390625
        %v448 = vmul.f32 %v444, 0.00390625
        %v449 = vmul.f32 %v445, %v445
        %v450 = vmul.f32 %v446, %v446
        %v451 = vsub.f32 %v447, %v449
        %v452 = vsub.f32 %v448, %v450
        %v453 = vmax.f32 %v451, 0.0
        %v454 = vmax.f32 %v452, 0.0
        %v455 = vadd.f32 %v453, 1e-05
        %v456 = vadd.f32 %v454, 1e-05
        %v457 = vrsqrt.pop %v455
        %v458 = vrsqrt.pop %v456
        %v459 = vmul.f32 %v278, %v457
        %v460 = vmul.f32 %v279, %v458
        %v461 = vmul.f32 %v445, %v459
        %v462 = vmul.f32 %v446, %v460
        %465 = vrot.lane.b32.xlu0 %v461, 1
        %v466 = vpop.permute.xlu0 %465
        %467 = vrot.lane.b32.xlu0 %v462, 1
        %v468 = vpop.permute.xlu0 %467
        %v471 = vsub.f32 %v278, %v466
        %v472 = vsub.f32 %v279, %v468
        %474 = vset.pattern.permute.xlu0 2
        %475 = vperm.xlu0 %474, %v459
        %v476 = vpop.permute.xlu0 %475
        %479 = vset.pattern.permute.xlu0 2
        %480 = vperm.xlu0 %479, %v460
        %v481 = vpop.permute.xlu0 %480
        %v483 = vmul.f32 %v377, %v476
        %v484 = vmul.f32 %v379, %v476
        %v485 = vmul.f32 %v383, %v481
        %v486 = vmul.f32 %v385, %v481
        %488 = vset.pattern.permute.xlu0 3
        %489 = vperm.xlu0 %488, %v471
        %v490 = vpop.permute.xlu0 %489
        %493 = vset.pattern.permute.xlu0 3
        %494 = vperm.xlu0 %493, %v472
        %v495 = vpop.permute.xlu0 %494
        %v497 = vadd.f32 %v483, %v490
        %v498 = vadd.f32 %v484, %v490
        %v499 = vadd.f32 %v485, %v495
        %v500 = vadd.f32 %v486, %v495
        %501 = vrot.lane.b32.xlu0 %v427, 17
        %v502 = vpop.permute.xlu0 %501
        %503 = vrot.lane.b32.xlu0 %v428, 17
        %v504 = vpop.permute.xlu0 %503
        %v505 = vlaneseq
        %v506 = vand.u32 %v505, 127
        %vm507 = vcmp.lt.s32.totalorder %v506, 17
        %v508 = vsel %vm507, %v502, %v504
        %v509 = vsel %vm507, %v504, %v502
        %v510 = vld [vmem:[%s4] ss:$8 sm:$0x3]
        %v512 = vlaneseq
        %v513 = vshrl.u32 %v512, 7
        %v514 = vsub.s32 0, %v513
        %v515 = vrot.slane %v510, %v514
        %v516 = vlaneseq
        %v517 = vshrl.u32 %v516, 7
        %v518 = vsub.s32 1, %v517
        %v519 = vrot.slane %v510, %v518
        %v522 = vmul.f32 %v509, %v515
        %v523 = vmul.f32 %v508, %v519
        %524 = vrot.lane.b32.xlu0 %v427, 16
        %v525 = vpop.permute.xlu0 %524
        %526 = vrot.lane.b32.xlu0 %v428, 16
        %v527 = vpop.permute.xlu0 %526
        %vm528 = vcmp.lt.s32.totalorder %v506, 16
        %v529 = vsel %vm528, %v525, %v527
        %v530 = vsel %vm528, %v527, %v525
        %s531 = scalar_lea.vmem %s4, 1
        %v532 = vld [vmem:[%s531] ss:$8 sm:$0x3]
        %v534 = vlaneseq
        %v535 = vshrl.u32 %v534, 7
        %v536 = vsub.s32 0, %v535
        %v537 = vrot.slane %v532, %v536
        %v538 = vlaneseq
        %v539 = vshrl.u32 %v538, 7
        %v540 = vsub.s32 1, %v539
        %v541 = vrot.slane %v532, %v540
        %v544 = vmul.f32 %v530, %v537
        %v545 = vmul.f32 %v529, %v541
        %546 = vrot.lane.b32.xlu0 %v427, 15
        %v547 = vpop.permute.xlu0 %546
        %548 = vrot.lane.b32.xlu0 %v428, 15
        %v549 = vpop.permute.xlu0 %548
        %vm550 = vcmp.lt.s32.totalorder %v506, 15
        %v551 = vsel %vm550, %v547, %v549
        %v552 = vsel %vm550, %v549, %v547
        %s553 = scalar_lea.vmem %s4, 2
        %v554 = vld [vmem:[%s553] ss:$8 sm:$0x3]
        %v556 = vlaneseq
        %v557 = vshrl.u32 %v556, 7
        %v558 = vsub.s32 0, %v557
        %v559 = vrot.slane %v554, %v558
        %v560 = vlaneseq
        %v561 = vshrl.u32 %v560, 7
        %v562 = vsub.s32 1, %v561
        %v563 = vrot.slane %v554, %v562
        %v566 = vmul.f32 %v552, %v559
        %v567 = vmul.f32 %v551, %v563
        %568 = vrot.lane.b32.xlu0 %v427, 1
        %v569 = vpop.permute.xlu0 %568
        %570 = vrot.lane.b32.xlu0 %v428, 1
        %v571 = vpop.permute.xlu0 %570
        %vm572 = vcmp.lt.s32.totalorder %v506, 1
        %v573 = vsel %vm572, %v569, %v571
        %v574 = vsel %vm572, %v571, %v569
        %s575 = scalar_lea.vmem %s4, 3
        %v576 = vld [vmem:[%s575] ss:$8 sm:$0x3]
        %v578 = vlaneseq
        %v579 = vshrl.u32 %v578, 7
        %v580 = vsub.s32 0, %v579
        %v581 = vrot.slane %v576, %v580
        %v582 = vlaneseq
        %v583 = vshrl.u32 %v582, 7
        %v584 = vsub.s32 1, %v583
        %v585 = vrot.slane %v576, %v584
        %v588 = vmul.f32 %v574, %v581
        %v589 = vmul.f32 %v573, %v585
        %590 = vrot.lane.b32.xlu0 %v427, 127
        %v591 = vpop.permute.xlu0 %590
        %592 = vrot.lane.b32.xlu0 %v428, 127
        %v593 = vpop.permute.xlu0 %592
        %vm594 = vcmp.lt.s32.totalorder %v506, 127
        %v595 = vsel %vm594, %v591, %v593
        %v596 = vsel %vm594, %v593, %v591
        %s597 = scalar_lea.vmem %s4, 5
        %v598 = vld [vmem:[%s597] ss:$8 sm:$0x3]
        %v600 = vlaneseq
        %v601 = vshrl.u32 %v600, 7
        %v602 = vsub.s32 0, %v601
        %v603 = vrot.slane %v598, %v602
        %v604 = vlaneseq
        %v605 = vshrl.u32 %v604, 7
        %v606 = vsub.s32 1, %v605
        %v607 = vrot.slane %v598, %v606
        %v610 = vmul.f32 %v595, %v603
        %v611 = vmul.f32 %v596, %v607
        %612 = vrot.lane.b32.xlu0 %v427, 113
        %v613 = vpop.permute.xlu0 %612
        %614 = vrot.lane.b32.xlu0 %v428, 113
        %v615 = vpop.permute.xlu0 %614
        %vm616 = vcmp.lt.s32.totalorder %v506, 113
        %v617 = vsel %vm616, %v613, %v615
        %v618 = vsel %vm616, %v615, %v613
        %s619 = scalar_lea.vmem %s4, 6
        %v620 = vld [vmem:[%s619] ss:$8 sm:$0x3]
        %v622 = vlaneseq
        %v623 = vshrl.u32 %v622, 7
        %v624 = vsub.s32 0, %v623
        %v625 = vrot.slane %v620, %v624
        %v626 = vlaneseq
        %v627 = vshrl.u32 %v626, 7
        %v628 = vsub.s32 1, %v627
        %v629 = vrot.slane %v620, %v628
        %v632 = vmul.f32 %v617, %v625
        %v633 = vmul.f32 %v618, %v629
        %634 = vrot.lane.b32.xlu0 %v427, 112
        %v635 = vpop.permute.xlu0 %634
        %636 = vrot.lane.b32.xlu0 %v428, 112
        %v637 = vpop.permute.xlu0 %636
        %vm638 = vcmp.lt.s32.totalorder %v506, 112
        %v639 = vsel %vm638, %v635, %v637
        %v640 = vsel %vm638, %v637, %v635
        %s641 = scalar_lea.vmem %s4, 7
        %v642 = vld [vmem:[%s641] ss:$8 sm:$0x3]
        %v644 = vlaneseq
        %v645 = vshrl.u32 %v644, 7
        %v646 = vsub.s32 0, %v645
        %v647 = vrot.slane %v642, %v646
        %v648 = vlaneseq
        %v649 = vshrl.u32 %v648, 7
        %v650 = vsub.s32 1, %v649
        %v651 = vrot.slane %v642, %v650
        %v654 = vmul.f32 %v639, %v647
        %v655 = vmul.f32 %v640, %v651
        %656 = vrot.lane.b32.xlu0 %v427, 111
        %v657 = vpop.permute.xlu0 %656
        %658 = vrot.lane.b32.xlu0 %v428, 111
        %v659 = vpop.permute.xlu0 %658
        %vm660 = vcmp.lt.s32.totalorder %v506, 111
        %v661 = vsel %vm660, %v657, %v659
        %v662 = vsel %vm660, %v659, %v657
        %s663 = scalar_lea.vmem %s4, 16
        %v664 = vld [vmem:[%s663] ss:$8 sm:$0x3]
        %v666 = vlaneseq
        %v667 = vshrl.u32 %v666, 7
        %v668 = vsub.s32 0, %v667
        %v669 = vrot.slane %v664, %v668
        %v670 = vlaneseq
        %v671 = vshrl.u32 %v670, 7
        %v672 = vsub.s32 1, %v671
        %v673 = vrot.slane %v664, %v672
        %v676 = vmul.f32 %v661, %v669
        %v677 = vmul.f32 %v662, %v673
        %v680 = vrot.slane %v544, 4
        %v681 = vrot.slane %v545, 4
        %v686 = vrot.slane %v588, 4
        %v687 = vrot.slane %v589, 4
        %v692 = vrot.slane %v610, 4
        %v693 = vrot.slane %v611, 4
        %v698 = vrot.slane %v654, 4
        %v699 = vrot.slane %v655, 4
        %v702 = vsel %vm299, %v522, %v680
        %v703 = vsel %vm299, %v523, %v681
        %v704 = vsel %vm299, %v566, %v686
        %v705 = vsel %vm299, %v567, %v687
        %v706 = vsel %vm299, %v427, %v692
        %v707 = vsel %vm299, %v428, %v693
        %v708 = vsel %vm299, %v632, %v698
        %v709 = vsel %vm299, %v633, %v699
        %vm710 = vcmask 293888
        %v712 = vsel %vm710, %v283, 0
        %v715 = vsel %vm299, %v676, 0
        %v718 = vsel %vm299, %v677, 0
        %720 = vmatprep.subr.mxu0 0.0
        %721 = vmatpush1.msra.mxu0 0.0
        %722 = vmatprep.subr.mxu0 0.0
        %723 = vmatpush1.msra.mxu0 0.0
        %724 = vmatprep.subr.mxu0 0.0
        %725 = vmatpush1.msra.mxu0 0.0
        %726 = vmatprep.subr.mxu0 0.0
        %727 = vmatpush1.msra.mxu0 0.0
        %728 = vmatprep.subr.mxu0 0.0
        %729 = vmatpush1.msra.mxu0 0.0
        %730 = vmatprep.subr.mxu0 0.0
        %731 = vmatpush1.msra.mxu0 0.0
        %732 = vmatprep.subr.mxu0 0.0
        %733 = vmatpush1.msra.mxu0 0.0
        %734 = vmatprep.subr.mxu0 0.0
        %735 = vmatpush1.msra.mxu0 0.0
        %736 = vmatprep.subr.mxu0 0.0
        %737 = vmatpush1.msra.mxu0 0.0
        %738 = vmatprep.subr.mxu0 0.0
        %739 = vmatpush1.msra.mxu0 0.0
        %740 = vmatprep.subr.mxu0 0.0
        %741 = vmatpush1.msra.mxu0 0.0
        %742 = vmatprep.subr.mxu0 %v718
        %743 = vmatpush1.msra.mxu0 %v715
        %744 = vmatprep.subr.mxu0 %v709
        %745 = vmatpush1.msra.mxu0 %v708
        %746 = vmatprep.subr.mxu0 %v707
        %747 = vmatpush1.msra.mxu0 %v706
        %748 = vmatprep.subr.mxu0 %v705
        %749 = vmatpush1.msra.mxu0 %v704
        %750 = vmatprep.subr.mxu0 %v703
        %751 = vmatpush1.msra.mxu0 %v702
        %752 = vmatprep.subr.mxu0 0.0
        %753 = vmatpush2.msra.mxu0 0.0
        %754 = vmatprep.subr.mxu0 0.0
        %755 = vmatpush2.msra.mxu0 0.0
        %756 = vmatprep.subr.mxu0 0.0
        %757 = vmatpush2.msra.mxu0 0.0
        %758 = vmatprep.subr.mxu0 0.0
        %759 = vmatpush2.msra.mxu0 0.0
        %760 = vmatprep.subr.mxu0 0.0
        %761 = vmatpush2.msra.mxu0 0.0
        %762 = vmatprep.subr.mxu0 0.0
        %763 = vmatpush2.msra.mxu0 0.0
        %764 = vmatprep.subr.mxu0 0.0
        %765 = vmatpush2.msra.mxu0 0.0
        %766 = vmatprep.subr.mxu0 0.0
        %767 = vmatpush2.msra.mxu0 0.0
        %768 = vmatprep.subr.mxu0 0.0
        %769 = vmatpush2.msra.mxu0 0.0
        %770 = vmatprep.subr.mxu0 0.0
        %771 = vmatpush2.msra.mxu0 0.0
        %772 = vmatprep.subr.mxu0 0.0
        %773 = vmatpush2.msra.mxu0 0.0
        %774 = vmatprep.subr.mxu0 0.0
        %775 = vmatpush2.msra.mxu0 0.0
        %776 = vmatprep.subr.mxu0 0.0
        %777 = vmatpush2.msra.mxu0 0.0
        %778 = vmatprep.subr.mxu0 0.0
        %779 = vmatpush2.msra.mxu0 0.0
        %780 = vmatprep.subr.mxu0 0.0
        %781 = vmatpush2.msra.mxu0 0.0
        %782 = vmatprep.subr.mxu0 0.0
        %783 = vmatpush2.msra.mxu0 0.0
        %784 = vmatprep.mubr.f32.mxu0 0.0
        %785 = vmatmul.mubr.f32.gmra.mxu0 %v712
        %v786 = vpop.f32.mrf.mxu0
        %v787 = vadd.f32 0.0, %v786
        %v788 = vpop.f32.mrf.mxu0
        %v789 = vadd.f32 0.0, %v788
        %790 = vdwg.mxu0
        %v791 = vsel %vm299, %v787, 0.0
        %v792 = vsel %vm299, %v789, 0.0
        %v793 = vadd.f32 %v791, %v792
        %794 = vadd.xlane.f32.xlu0 %v793
        %v795 = vpop.xlane.xlu0 %794
        %v796 = vmul.f32 %v787, %v787
        %v797 = vmul.f32 %v789, %v789
        %v798 = vsel %vm299, %v796, 0.0
        %v799 = vsel %vm299, %v797, 0.0
        %v800 = vadd.f32 %v798, %v799
        %801 = vadd.xlane.f32.xlu0 %v800
        %v802 = vpop.xlane.xlu0 %801
        %v803 = vmul.f32 %v795, 0.00390625
        %v804 = vmul.f32 %v802, 0.00390625
        %v805 = vmul.f32 %v803, %v803
        %v806 = vsub.f32 %v804, %v805
        %v807 = vmax.f32 %v806, 0.0
        %v808 = vadd.f32 %v807, 1e-05
        %v809 = vrsqrt.pop %v808
        %v810 = vmul.f32 %v277, %v809
        %v811 = vmul.f32 %v803, %v810
        %813 = vrot.lane.b32.xlu0 %v811, 1
        %v814 = vpop.permute.xlu0 %813
        %v816 = vsub.f32 %v277, %v814
        %818 = vset.pattern.permute.xlu0 2
        %819 = vperm.xlu0 %818, %v810
        %v820 = vpop.permute.xlu0 %819
        %v822 = vmul.f32 %v787, %v820
        %v823 = vmul.f32 %v789, %v820
        %825 = vset.pattern.permute.xlu0 3
        %826 = vperm.xlu0 %825, %v816
        %v827 = vpop.permute.xlu0 %826
        %v829 = vadd.f32 %v822, %v827
        %v830 = vadd.f32 %v823, %v827
        %v831 = vmax.f32 %v829, 0.0
        %v832 = vmax.f32 %v830, 0.0
        %v834 = vsel %vm289, %v284, 0
        %v837 = vsel %vm289, %v285, 0
        %v840 = vsel %vm299, %v831, 0
        %v843 = vsel %vm299, %v832, 0
        %845 = vmatprep.subr.mxu0 0.0
        %846 = vmatpush1.msra.mxu0 0.0
        %847 = vmatprep.subr.mxu0 0.0
        %848 = vmatpush1.msra.mxu0 0.0
        %849 = vmatprep.subr.mxu0 0.0
        %850 = vmatpush1.msra.mxu0 0.0
        %851 = vmatprep.subr.mxu0 0.0
        %852 = vmatpush1.msra.mxu0 0.0
        %853 = vmatprep.subr.mxu0 0.0
        %854 = vmatpush1.msra.mxu0 0.0
        %855 = vmatprep.subr.mxu0 0.0
        %856 = vmatpush1.msra.mxu0 0.0
        %857 = vmatprep.subr.mxu0 0.0
        %858 = vmatpush1.msra.mxu0 0.0
        %859 = vmatprep.subr.mxu0 0.0
        %860 = vmatpush1.msra.mxu0 0.0
        %861 = vmatprep.subr.mxu0 0.0
        %862 = vmatpush1.msra.mxu0 0.0
        %863 = vmatprep.subr.mxu0 0.0
        %864 = vmatpush1.msra.mxu0 0.0
        %865 = vmatprep.subr.mxu0 0.0
        %866 = vmatpush1.msra.mxu0 0.0
        %867 = vmatprep.subr.mxu0 0.0
        %868 = vmatpush1.msra.mxu0 0.0
        %869 = vmatprep.subr.mxu0 0.0
        %870 = vmatpush1.msra.mxu0 0.0
        %871 = vmatprep.subr.mxu0 0.0
        %872 = vmatpush1.msra.mxu0 0.0
        %873 = vmatprep.subr.mxu0 0.0
        %874 = vmatpush1.msra.mxu0 0.0
        %875 = vmatprep.subr.mxu0 %v843
        %876 = vmatpush1.msra.mxu0 %v840
        %877 = vmatprep.subr.mxu0 0.0
        %878 = vmatpush2.msra.mxu0 0.0
        %879 = vmatprep.subr.mxu0 0.0
        %880 = vmatpush2.msra.mxu0 0.0
        %881 = vmatprep.subr.mxu0 0.0
        %882 = vmatpush2.msra.mxu0 0.0
        %883 = vmatprep.subr.mxu0 0.0
        %884 = vmatpush2.msra.mxu0 0.0
        %885 = vmatprep.subr.mxu0 0.0
        %886 = vmatpush2.msra.mxu0 0.0
        %887 = vmatprep.subr.mxu0 0.0
        %888 = vmatpush2.msra.mxu0 0.0
        %889 = vmatprep.subr.mxu0 0.0
        %890 = vmatpush2.msra.mxu0 0.0
        %891 = vmatprep.subr.mxu0 0.0
        %892 = vmatpush2.msra.mxu0 0.0
        %893 = vmatprep.subr.mxu0 0.0
        %894 = vmatpush2.msra.mxu0 0.0
        %895 = vmatprep.subr.mxu0 0.0
        %896 = vmatpush2.msra.mxu0 0.0
        %897 = vmatprep.subr.mxu0 0.0
        %898 = vmatpush2.msra.mxu0 0.0
        %899 = vmatprep.subr.mxu0 0.0
        %900 = vmatpush2.msra.mxu0 0.0
        %901 = vmatprep.subr.mxu0 0.0
        %902 = vmatpush2.msra.mxu0 0.0
        %903 = vmatprep.subr.mxu0 0.0
        %904 = vmatpush2.msra.mxu0 0.0
        %905 = vmatprep.subr.mxu0 0.0
        %906 = vmatpush2.msra.mxu0 0.0
        %907 = vmatprep.subr.mxu0 0.0
        %908 = vmatpush2.msra.mxu0 0.0
        %909 = vmatprep.mubr.f32.mxu0 0.0
        %910 = vmatmul.mubr.f32.gmra.mxu0 %v834
        %v911 = vpop.f32.mrf.mxu0
        %v912 = vadd.f32 0.0, %v911
        %v913 = vpop.f32.mrf.mxu0
        %v914 = vadd.f32 0.0, %v913
        %915 = vmatprep.mubr.f32.mxu0 0.0
        %916 = vmatmul.mubr.f32.gmra.mxu0 %v837
        %v917 = vpop.f32.mrf.mxu0
        %v918 = vadd.f32 0.0, %v917
        %v919 = vpop.f32.mrf.mxu0
        %v920 = vadd.f32 0.0, %v919
        %921 = vdwg.mxu0
        %v922 = vadd.f32 %v912, %v914
        %923 = vadd.xlane.f32.xlu0 %v922
        %v924 = vpop.xlane.xlu0 %923
        %v925 = vadd.f32 %v918, %v920
        %926 = vadd.xlane.f32.xlu0 %v925
        %v927 = vpop.xlane.xlu0 %926
        %v928 = vmul.f32 %v912, %v912
        %v929 = vmul.f32 %v914, %v914
        %v930 = vmul.f32 %v918, %v918
        %v931 = vmul.f32 %v920, %v920
        %v932 = vadd.f32 %v928, %v929
        %933 = vadd.xlane.f32.xlu0 %v932
        %v934 = vpop.xlane.xlu0 %933
        %v935 = vadd.f32 %v930, %v931
        %936 = vadd.xlane.f32.xlu0 %v935
        %v937 = vpop.xlane.xlu0 %936
        %v938 = vmul.f32 %v924, 0.00390625
        %v939 = vmul.f32 %v927, 0.00390625
        %v940 = vmul.f32 %v934, 0.00390625
        %v941 = vmul.f32 %v937, 0.00390625
        %v942 = vmul.f32 %v938, %v938
        %v943 = vmul.f32 %v939, %v939
        %v944 = vsub.f32 %v940, %v942
        %v945 = vsub.f32 %v941, %v943
        %v946 = vmax.f32 %v944, 0.0
        %v947 = vmax.f32 %v945, 0.0
        %v948 = vadd.f32 %v946, 1e-05
        %v949 = vadd.f32 %v947, 1e-05
        %v950 = vrsqrt.pop %v948
        %v951 = vrsqrt.pop %v949
        %v952 = vmul.f32 %v278, %v950
        %v953 = vmul.f32 %v279, %v951
        %v954 = vmul.f32 %v938, %v952
        %v955 = vmul.f32 %v939, %v953
        %958 = vrot.lane.b32.xlu0 %v954, 1
        %v959 = vpop.permute.xlu0 %958
        %960 = vrot.lane.b32.xlu0 %v955, 1
        %v961 = vpop.permute.xlu0 %960
        %v964 = vsub.f32 %v278, %v959
        %v965 = vsub.f32 %v279, %v961
        %967 = vset.pattern.permute.xlu0 0
        %968 = vperm.xlu0 %967, %v952
        %v969 = vpop.permute.xlu0 %968
        %972 = vset.pattern.permute.xlu0 0
        %973 = vperm.xlu0 %972, %v953
        %v974 = vpop.permute.xlu0 %973
        %v976 = vmul.f32 %v912, %v969
        %v977 = vmul.f32 %v914, %v969
        %v978 = vmul.f32 %v918, %v974
        %v979 = vmul.f32 %v920, %v974
        %981 = vset.pattern.permute.xlu0 1
        %982 = vperm.xlu0 %981, %v964
        %v983 = vpop.permute.xlu0 %982
        %986 = vset.pattern.permute.xlu0 1
        %987 = vperm.xlu0 %986, %v965
        %v988 = vpop.permute.xlu0 %987
        %v990 = vadd.f32 %v976, %v983
        %v991 = vadd.f32 %v977, %v983
        %v992 = vadd.f32 %v978, %v988
        %v993 = vadd.f32 %v979, %v988
        %v994 = vadd.f32 %v990, %v497
        %v995 = vadd.f32 %v991, %v498
        %v996 = vadd.f32 %v992, %v499
        %v997 = vadd.f32 %v993, %v500
        %v998 = vmax.f32 %v994, 0.0
        %v999 = vmax.f32 %v995, 0.0
        %v1000 = vmax.f32 %v996, 0.0
        %v1001 = vmax.f32 %v997, 0.0
        %1002 = vst [vmem:[%s271] sm:$0xff] %v998
        %1003 = vst [vmem:[%s271 + $0x8] sm:$0xff] %v999
        %1004 = vst [vmem:[%s271 + $0x10] sm:$0xff] %v1000
        %1005 = vst [vmem:[%s271 + $0x18] sm:$0xff] %v1001
        %s1006 = sand.u32 %s181, 1
        %s1007 = scalar_lea.sflag [#allocation3], %s1006
        %s1008 = sand.u32 %s181, 1
        %s1009 = smul.addr %s1008, 32
        %s1010 = scalar_lea.vmem [#allocation2], %s1009
        // Predicated region
        $region49: #{tpu_custom_call.1} parent=47 // pred_check
          %p1011 = pneg %p191
        $region50: #{tpu_custom_call.1} parent=47 // pred_check_branch
          %1013 = sbr.rel (%p1011) target = $region52
        $region51: #{tpu_custom_call.1} parent=47 // pred_region
          %s1015 = ssub.s32 512, 512
          %1016 = vsyncadd %s1007, %s1015
          %s1017 = smul.addr %s21, 4
          %s1018 = smul.addr %s1017, 128
          %s1019 = scalar_lea.hbm %s7, %s1018
          %s1020 = sshll.u32 %s1010, 4
          %s1021 = int_to_ptr.vmem [resolvable:$true] %s1020
          %1026 = dma.vmem_to_hbm [thread:$0]  %s1021, 512, %s1019, %s1007, 256, 256, 16
        $region52: #{tpu_custom_call.1} parent=47 // pred_fallthru
          _
      $region48: #{tpu_custom_call.1} parent=5 // pred_fallthru
        _
      %p1027 = scmp.le.s32.totalorder 2, %s16
      // Predicated region
      $region53: #{tpu_custom_call.1} parent=5 // pred_check
        %p1028 = pneg %p1027
      $region54: #{tpu_custom_call.1} parent=5 // pred_check_branch
        %1030 = sbr.rel (%p1028) target = $region56
      $region55: #{tpu_custom_call.1} parent=5 // pred_region
        %s1031 = ssub.s32 %s16, 2
        // Predicated region
        $region57: #{tpu_custom_call.1} parent=55 // pred_check
          %p1032 = pneg %p197
        $region58: #{tpu_custom_call.1} parent=55 // pred_check_branch
          %1034 = sbr.rel (%p1032) target = $region60
        $region59: #{tpu_custom_call.1} parent=55 // pred_region
          %s1035 = sand.u32 %s182, 1
          %s1036 = scalar_lea.sflag [#allocation3], %s1035
          %s1037 = sand.u32 %s182, 1
          %s1038 = smul.addr %s1037, 32
          %s1039 = scalar_lea.vmem [#allocation2], %s1038
          %1040 = dma.done %s1036, 512
        $region60: #{tpu_custom_call.1} parent=55 // pred_fallthru
          _
      $region56: #{tpu_custom_call.1} parent=5 // pred_fallthru
        _
    $region6: #{tpu_custom_call.1} parent=1 // loop_footer
      %s20 = sadd.s32 1, %s16
    $region7: #{tpu_custom_call.1} parent=1 // loop_footer_branch
      %15 = sbr.rel target = $region3
    $region8: #{tpu_custom_call.1} parent=1 // loop_exit
      _
    %1041 = vsyncpa [#allocation3], 1
    %s1042 = scalar_lea.sflag [#allocation3], 1
    %1043 = vsyncpa %s1042, 1

</llo_original>
